<compile_context>
chip_gen: v7x
topology: tpu7x:2x2x1
jax: 0.10.0
libtpu: 0.0.40
codegen_flags: <defaults>
</compile_context>

<pallas_src>
import functools

import jax
import jax.numpy as jnp
from jax.experimental import pallas as pl
from jax.experimental.pallas import tpu as pltpu


# ---------------------------------------------------------------------------
# Kernel
# ---------------------------------------------------------------------------
def _actor_mlp_kernel(x_ref, w1_ref, b1_ref, w2_ref, b2_ref, w3_ref, b3_ref,
                      mu_ref):
    """3-layer MLP for one batch tile, batch on the lane axis.

    x_ref  : (TB, n_obs)  native dtype (f32 or bf16) -- natural batch-major tile
    w1_ref : (H, n_obs)   bf16    b1_ref: (H, 1)  ew-dtype (bf16 or f32)
    w2_ref : (H, H)       bf16    b2_ref: (H, 1)  ew-dtype
    w3_ref : (1, H)       bf16    b3_ref: (1, 1)  f32
    mu_ref : (1, TB)      f32     lane-dense output row
    """
    ew = b1_ref.dtype                      # elementwise dtype (bf16 on v6e/v7x)
    x_bf = x_ref[...].astype(jnp.bfloat16)                    # (TB, n_obs)

    # NT matmul: contract axis 1 of both operands => W1 @ x^T without a
    # wrapper-side transpose; any transpose work lands on the idle XLU slot.
    nt = (((1,), (1,)), ((), ()))
    h1 = jax.lax.dot_general(w1_ref[...], x_bf, nt,
                             preferred_element_type=jnp.float32)   # (H, TB) f32
    h1 = jnp.tanh(h1.astype(ew) + b1_ref[...]).astype(jnp.bfloat16)

    h2 = jnp.dot(w2_ref[...], h1,
                 preferred_element_type=jnp.float32)               # (H, TB) f32
    h2 = jnp.tanh(h2.astype(ew) + b2_ref[...]).astype(jnp.bfloat16)

    # Final layer stays on the MXU; (1, TB) output is lane-dense.
    mu = jnp.dot(w3_ref[...], h2,
                 preferred_element_type=jnp.float32)               # (1, TB) f32
    mu_ref[...] = (mu + b3_ref[...]).astype(mu_ref.dtype)


# ---------------------------------------------------------------------------
# Wrapper
# ---------------------------------------------------------------------------
def _round_up(v, m):
    return ((v + m - 1) // m) * m


def _choose_batch_tile(batch, batch_tile):
    """Adaptive, lane-aligned tile; even (>=2) tile count for big batches (v7x)."""
    b128 = _round_up(max(int(batch), 1), 128)
    if b128 <= 128:
        return 128                          # tiny batch: one tile, no waste
    n_tiles = max(2, -(-b128 // int(batch_tile)))
    if n_tiles % 2:
        n_tiles += 1                        # even tile count -> no idle TC on v7x
    return _round_up(-(-b128 // n_tiles), 128)


def _default_elementwise_dtype():
    """bf16 bias-add/tanh on v6e/v7x (bf16 VPU/EUP); f32 on v5e and older."""
    try:
        kind = jax.devices()[0].device_kind.lower()
    except Exception:
        return jnp.float32
    if "v6" in kind or "v7" in kind or "7x" in kind:
        return jnp.bfloat16
    return jnp.float32


def prepare_actor_params(params, elementwise_dtype=None):
    """One-time conversion to the kernel-resident layout/dtypes (call once)."""
    if elementwise_dtype is None:
        elementwise_dtype = _default_elementwise_dtype()
    w1, b1, w2, b2, w3, b3 = params         # PyTorch layout: W (out, in), b (out,)
    H = w1.shape[0]
    return (w1.astype(jnp.bfloat16),
            b1.reshape(H, 1).astype(elementwise_dtype),
            w2.astype(jnp.bfloat16),
            b2.reshape(H, 1).astype(elementwise_dtype),
            w3.astype(jnp.bfloat16),
            b3.reshape(1, 1).astype(jnp.float32))


@functools.partial(jax.jit, static_argnames=("batch_tile",))
def actor_forward(x, prepared_params, batch_tile=8192):
    """Returns (mu, std) parameterizing the Normal(mu, 1.0) the module emits."""
    w1, b1, w2, b2, w3, b3 = prepared_params
    B, n_obs = x.shape
    H = w1.shape[0]

    tb = _choose_batch_tile(B, batch_tile)
    num_tiles = pl.cdiv(B, tb)
    b_pad = num_tiles * tb

    if b_pad != B:                           # static (trace-time) branch
        x = jnp.pad(x, ((0, b_pad - B), (0, 0)))

    def full(shape):
        # Whole-array block, constant index map -> stays VMEM-resident.
        return pl.BlockSpec(shape, lambda i, _n=len(shape): (0,) * _n)

    out = pl.pallas_call(
        _actor_mlp_kernel,
        out_shape=jax.ShapeDtypeStruct((1, b_pad), jnp.float32),
        grid_spec=pltpu.PrefetchScalarGridSpec(
            num_scalar_prefetch=0,
            grid=(num_tiles,),
            in_specs=[
                pl.BlockSpec((tb, n_obs), lambda i: (i, 0)),   # x tile (natural layout)
                full((H, n_obs)), full((H, 1)),                # W1, b1
                full((H, H)),     full((H, 1)),                # W2, b2
                full((1, H)),     full((1, 1)),                # W3, b3
            ],
            out_specs=pl.BlockSpec((1, tb), lambda i: (0, i)),  # lane-dense row
        ),
        compiler_params=pltpu.CompilerParams(
            dimension_semantics=("parallel",)),                 # megacore / dual-TC
    )(x, w1, b1, w2, b2, w3, b3)

    mu = out[0, :B].reshape(B, 1)
    std = jnp.ones_like(mu)                                     # Normal(mu, 1.0)
    return mu, std


# ---------------------------------------------------------------------------
# Init + pure-JAX references
# ---------------------------------------------------------------------------
def init_actor_params(key, n_observations, hidden=64):
    """xavier_normal_(gain=1) weights, zero biases; PyTorch layout W: (out, in)."""
    def xavier(k, fan_out, fan_in):
        std = (2.0 / (fan_in + fan_out)) ** 0.5
        return jax.random.normal(k, (fan_out, fan_in), jnp.float32) * std

    k1, k2, k3 = jax.random.split(key, 3)
    return (xavier(k1, hidden, n_observations), jnp.zeros((hidden,), jnp.float32),
            xavier(k2, hidden, hidden),         jnp.zeros((hidden,), jnp.float32),
            xavier(k3, 1, hidden),              jnp.zeros((1,), jnp.float32))


def actor_forward_ref_f32(x, raw_params):
    """Pure-JAX f32 reference of the PyTorch forward."""
    w1, b1, w2, b2, w3, b3 = raw_params
    h1 = jnp.tanh(x @ w1.T + b1)
    h2 = jnp.tanh(h1 @ w2.T + b2)
    return (h2 @ w3.T + b3).reshape(-1, 1)


def actor_forward_ref_matched(x, prepared_params):
    """Pure-JAX reference using the same mixed-precision path as the kernel."""
    w1, b1, w2, b2, w3, b3 = prepared_params
    ew = b1.dtype
    x_bf = x.astype(jnp.bfloat16)
    nt = (((1,), (1,)), ((), ()))
    h1 = jax.lax.dot_general(w1, x_bf, nt, preferred_element_type=jnp.float32)
    h1 = jnp.tanh(h1.astype(ew) + b1).astype(jnp.bfloat16)
    h2 = jnp.dot(w2, h1, preferred_element_type=jnp.float32)
    h2 = jnp.tanh(h2.astype(ew) + b2).astype(jnp.bfloat16)
    mu = jnp.dot(w3, h2, preferred_element_type=jnp.float32) + b3
    return jnp.transpose(mu)                                   # (B, 1)


# ---------------------------------------------------------------------------
# Self-test
# ---------------------------------------------------------------------------
if __name__ == "__main__":
    key = jax.random.PRNGKey(0)
    k_param, k_x1, k_x2, k_x3 = jax.random.split(key, 4)

    n_observations = 32
    raw_params = init_actor_params(k_param, n_observations)
    params = prepare_actor_params(raw_params)
    ew = params[1].dtype
    tol = 1e-4 if ew == jnp.float32 else 5e-3   # bf16 elementwise on v6e/v7x

    # Tiny ragged batch -> single 128-wide tile, pad path.
    x_small = jax.random.normal(k_x1, (6, n_observations), jnp.float32)
    mu, std = actor_forward(x_small, params)
    mu, std = jax.block_until_ready((mu, std))
    assert mu.shape == (6, 1) and std.shape == (6, 1)
    assert bool(jnp.all(std == 1.0))
    assert bool(jnp.allclose(mu, actor_forward_ref_matched(x_small, params),
                             atol=tol, rtol=tol))
    assert bool(jnp.allclose(mu, actor_forward_ref_f32(x_small, raw_params),
                             atol=5e-2, rtol=5e-2))

    # Ragged mid-size batch -> 2 parallel tiles (tb=256), pad path.
    x_mid = jax.random.normal(k_x2, (300, n_observations), jnp.float32)
    mu2, _ = actor_forward(x_mid, params)
    mu2 = jax.block_until_ready(mu2)
    assert mu2.shape == (300, 1)
    assert bool(jnp.allclose(mu2, actor_forward_ref_matched(x_mid, params),
                             atol=tol, rtol=tol))

    # Exact tile multiple -> zero wrapper ops on x, 2 parallel tiles.
    x_big = jax.random.normal(k_x3, (512, n_observations), jnp.float32)
    mu3, _ = actor_forward(x_big, params)
    mu3 = jax.block_until_ready(mu3)
    assert mu3.shape == (512, 1)
    assert bool(jnp.allclose(mu3, actor_forward_ref_matched(x_big, params),
                             atol=tol, rtol=tol))

    # TODO(synk): Normal(mu, 1.0) sampling / log_prob stay in plain JAX; the
    # kernel returns (mu, std=1.0) which fully parameterizes the distribution.
    print("KERNEL_OK")
</pallas_src>

<mosaic_0001>
module attributes {stable_mosaic.version = 11 : i64} {
  func.func @_actor_mlp_kernel(%arg0: i32, %arg1: memref<128x32xf32, #tpu.memory_space<vmem>>, %arg2: memref<64x32xbf16, #tpu.memory_space<vmem>>, %arg3: memref<64x1xf32, #tpu.memory_space<vmem>>, %arg4: memref<64x64xbf16, #tpu.memory_space<vmem>>, %arg5: memref<64x1xf32, #tpu.memory_space<vmem>>, %arg6: memref<1x64xbf16, #tpu.memory_space<vmem>>, %arg7: memref<1x1xf32, #tpu.memory_space<vmem>>, %arg8: memref<1x128xf32, #tpu.memory_space<vmem>>) attributes {dimension_semantics = [#tpu.dimension_semantics<parallel>], iteration_bounds = array<i64: 1>, scalar_prefetch = 0 : i64, scratch_operands = 0 : i64, tpu.core_type = #tpu.core_type<tc>, window_params = [{transform_indices = @transform_0, window_bounds = array<i64: 128, 32>}, {pipeline_mode = #tpu.pipeline_mode<synchronous>, transform_indices = @transform_1, window_bounds = array<i64: 64, 32>}, {pipeline_mode = #tpu.pipeline_mode<synchronous>, transform_indices = @transform_2, window_bounds = array<i64: 64, 1>}, {pipeline_mode = #tpu.pipeline_mode<synchronous>, transform_indices = @transform_3, window_bounds = array<i64: 64, 64>}, {pipeline_mode = #tpu.pipeline_mode<synchronous>, transform_indices = @transform_4, window_bounds = array<i64: 64, 1>}, {pipeline_mode = #tpu.pipeline_mode<synchronous>, transform_indices = @transform_5, window_bounds = array<i64: 1, 64>}, {pipeline_mode = #tpu.pipeline_mode<synchronous>, transform_indices = @transform_6, window_bounds = array<i64: 1, 1>}, {transform_indices = @transform_7, window_bounds = array<i64: 1, 128>}]} {
    %c0 = arith.constant 0 : index
    %c0_0 = arith.constant 0 : index
    %0 = vector.load %arg1[%c0, %c0_0] : memref<128x32xf32, #tpu.memory_space<vmem>>, vector<128x32xf32>
    %1 = arith.truncf %0 : vector<128x32xf32> to vector<128x32xbf16>
    %c0_1 = arith.constant 0 : index
    %c0_2 = arith.constant 0 : index
    %2 = vector.load %arg2[%c0_1, %c0_2] : memref<64x32xbf16, #tpu.memory_space<vmem>>, vector<64x32xbf16>
    %cst = arith.constant dense<0.000000e+00> : vector<64x128xf32>
    %3 = tpu.matmul %2, %1, %cst {dimension_numbers = #tpu.dot_dimension_numbers<[1], [1], [0], [0], [0, 0, 1, 0], [], []>} : vector<64x32xbf16>, vector<128x32xbf16>, vector<64x128xf32> -> vector<64x128xf32>
    %c0_3 = arith.constant 0 : index
    %c0_4 = arith.constant 0 : index
    %4 = vector.load %arg3[%c0_3, %c0_4] : memref<64x1xf32, #tpu.memory_space<vmem>>, vector<64x1xf32>
    %5 = vector.broadcast %4 : vector<64x1xf32> to vector<64x128xf32>
    %6 = arith.addf %3, %5 : vector<64x128xf32>
    %7 = math.tanh %6 : vector<64x128xf32>
    %8 = arith.truncf %7 : vector<64x128xf32> to vector<64x128xbf16>
    %c0_5 = arith.constant 0 : index
    %c0_6 = arith.constant 0 : index
    %9 = vector.load %arg4[%c0_5, %c0_6] : memref<64x64xbf16, #tpu.memory_space<vmem>>, vector<64x64xbf16>
    %cst_7 = arith.constant dense<0.000000e+00> : vector<64x128xf32>
    %10 = tpu.matmul %9, %8, %cst_7 {dimension_numbers = #tpu.dot_dimension_numbers<[1], [0], [0], [1], [0, 0, 1, 1], [], []>} : vector<64x64xbf16>, vector<64x128xbf16>, vector<64x128xf32> -> vector<64x128xf32>
    %c0_8 = arith.constant 0 : index
    %c0_9 = arith.constant 0 : index
    %11 = vector.load %arg5[%c0_8, %c0_9] : memref<64x1xf32, #tpu.memory_space<vmem>>, vector<64x1xf32>
    %12 = vector.broadcast %11 : vector<64x1xf32> to vector<64x128xf32>
    %13 = arith.addf %10, %12 : vector<64x128xf32>
    %14 = math.tanh %13 : vector<64x128xf32>
    %15 = arith.truncf %14 : vector<64x128xf32> to vector<64x128xbf16>
    %c0_10 = arith.constant 0 : index
    %c0_11 = arith.constant 0 : index
    %16 = vector.load %arg6[%c0_10, %c0_11] : memref<1x64xbf16, #tpu.memory_space<vmem>>, vector<1x64xbf16>
    %cst_12 = arith.constant dense<0.000000e+00> : vector<1x128xf32>
    %17 = tpu.matmul %16, %15, %cst_12 {dimension_numbers = #tpu.dot_dimension_numbers<[1], [0], [0], [1], [0, 0, 1, 1], [], []>} : vector<1x64xbf16>, vector<64x128xbf16>, vector<1x128xf32> -> vector<1x128xf32>
    %c0_13 = arith.constant 0 : index
    %c0_14 = arith.constant 0 : index
    %18 = vector.load %arg7[%c0_13, %c0_14] : memref<1x1xf32, #tpu.memory_space<vmem>>, vector<1x1xf32>
    %19 = vector.broadcast %18 : vector<1x1xf32> to vector<1x128xf32>
    %20 = arith.addf %17, %19 : vector<1x128xf32>
    %c0_15 = arith.constant 0 : index
    %c0_16 = arith.constant 0 : index
    %21 = vector.load %arg8[%c0_15, %c0_16] : memref<1x128xf32, #tpu.memory_space<vmem>>, vector<1x128xf32>
    tpu.vector_store %arg8[%c0_15, %c0_16], %20 {strides = array<i32>} : memref<1x128xf32, #tpu.memory_space<vmem>>, vector<1x128xf32>,
    return
  }
  func.func @transform_0(%arg0: i32) -> (i32, i32) {
    %c0_i32 = arith.constant 0 : i32
    %c0_i32_0 = arith.constant 0 : i32
    return %arg0, %c0_i32 : i32, i32
  }
  func.func @transform_1(%arg0: i32) -> (i32, i32) {
    %c0_i32 = arith.constant 0 : i32
    %c0_i32_0 = arith.constant 0 : i32
    %c0_i32_1 = arith.constant 0 : i32
    return %c0_i32, %c0_i32_0 : i32, i32
  }
  func.func @transform_2(%arg0: i32) -> (i32, i32) {
    %c0_i32 = arith.constant 0 : i32
    %c0_i32_0 = arith.constant 0 : i32
    %c0_i32_1 = arith.constant 0 : i32
    return %c0_i32, %c0_i32_0 : i32, i32
  }
  func.func @transform_3(%arg0: i32) -> (i32, i32) {
    %c0_i32 = arith.constant 0 : i32
    %c0_i32_0 = arith.constant 0 : i32
    %c0_i32_1 = arith.constant 0 : i32
    return %c0_i32, %c0_i32_0 : i32, i32
  }
  func.func @transform_4(%arg0: i32) -> (i32, i32) {
    %c0_i32 = arith.constant 0 : i32
    %c0_i32_0 = arith.constant 0 : i32
    %c0_i32_1 = arith.constant 0 : i32
    return %c0_i32, %c0_i32_0 : i32, i32
  }
  func.func @transform_5(%arg0: i32) -> (i32, i32) {
    %c0_i32 = arith.constant 0 : i32
    %c0_i32_0 = arith.constant 0 : i32
    %c0_i32_1 = arith.constant 0 : i32
    return %c0_i32, %c0_i32_0 : i32, i32
  }
  func.func @transform_6(%arg0: i32) -> (i32, i32) {
    %c0_i32 = arith.constant 0 : i32
    %c0_i32_0 = arith.constant 0 : i32
    %c0_i32_1 = arith.constant 0 : i32
    return %c0_i32, %c0_i32_0 : i32, i32
  }
  func.func @transform_7(%arg0: i32) -> (i32, i32) {
    %c0_i32 = arith.constant 0 : i32
    %c0_i32_0 = arith.constant 0 : i32
    return %c0_i32, %arg0 : i32, i32
  }
}

</mosaic_0001>

<llo_original>
// kernel: actor_forward.1
$region0: #{actor_forward.1}
  #allocation0 [shape = 'u32[]', space=smem, size = 0x4, offset = 0x4, fixed_abs, tag = 'smem constant byte address 0x4 - core index']
  #allocation1 [shape = 'u32[144,128]{1,0:T(1,128)}', space=vmem, size = 0x12000, scoped, tag = 'internal scratch']
  #allocation2 [shape = 'f32[1,1]{1,0:T(1,128)S(1)}', space=vmem, size = 0x200, scoped, tag = 'scoped memory for actor_forward.1']
  %s0 = inlined_call_operand.vmem [shape: f32[128,32], index: 0, kind: input, shape index: {}]
  %s1 = inlined_call_operand.vmem [shape: bf16[64,32], index: 1, kind: input, shape index: {}]
  %s2 = inlined_call_operand.vmem [shape: f32[64,1], index: 2, kind: input, shape index: {}]
  %s3 = inlined_call_operand.vmem [shape: bf16[64,64], index: 3, kind: input, shape index: {}]
  %s4 = inlined_call_operand.vmem [shape: f32[64,1], index: 4, kind: input, shape index: {}]
  %s5 = inlined_call_operand.vmem [shape: bf16[1,64], index: 5, kind: input, shape index: {}]
  %s6 = inlined_call_operand.<no memory space> [shape: f32[1,1], index: 6, kind: input, shape index: {}]
  %s7 = inlined_call_operand.vmem [shape: f32[1,128], index: 7, kind: output, shape index: {}]
  %s8 = sld [smem:[#allocation0]]
  $region38: #{actor_forward.1} parent=0
    _
  %s10 = ssub.s32 1, %s8
  %s11 = scalar_select 0, %s10, %s8
  %v12 = vstv %s6
  %13 = vst [vmem:[#allocation2] sm:$0x1] %v12
  // Predicated region
  $region2: #{actor_forward.1} parent=0 // pred_check
    _
  $region3: #{actor_forward.1} parent=0 // pred_check_branch
    %15 = sbr.rel (0) target = $region5
  $region4: #{actor_forward.1} parent=0 // pred_region
    _
  $region5: #{actor_forward.1} parent=0 // pred_fallthru
    _
  // Predicated region
  $region6: #{actor_forward.1} parent=0 // pred_check
    _
  $region7: #{actor_forward.1} parent=0 // pred_check_branch
    %17 = sbr.rel (0) target = $region9
  $region8: #{actor_forward.1} parent=0 // pred_region
    _
  $region9: #{actor_forward.1} parent=0 // pred_fallthru
    _
  // Predicated region
  $region10: #{actor_forward.1} parent=0 // pred_check
    _
  $region11: #{actor_forward.1} parent=0 // pred_check_branch
    %19 = sbr.rel (0) target = $region13
  $region12: #{actor_forward.1} parent=0 // pred_region
    _
  $region13: #{actor_forward.1} parent=0 // pred_fallthru
    _
  // Predicated region
  $region14: #{actor_forward.1} parent=0 // pred_check
    _
  $region15: #{actor_forward.1} parent=0 // pred_check_branch
    %21 = sbr.rel (0) target = $region17
  $region16: #{actor_forward.1} parent=0 // pred_region
    _
  $region17: #{actor_forward.1} parent=0 // pred_fallthru
    _
  // Predicated region
  $region18: #{actor_forward.1} parent=0 // pred_check
    _
  $region19: #{actor_forward.1} parent=0 // pred_check_branch
    %23 = sbr.rel (0) target = $region21
  $region20: #{actor_forward.1} parent=0 // pred_region
    _
  $region21: #{actor_forward.1} parent=0 // pred_fallthru
    _
  // Predicated region
  $region22: #{actor_forward.1} parent=0 // pred_check
    _
  $region23: #{actor_forward.1} parent=0 // pred_check_branch
    %25 = sbr.rel (0) target = $region25
  $region24: #{actor_forward.1} parent=0 // pred_region
    _
  $region25: #{actor_forward.1} parent=0 // pred_fallthru
    _
  // Predicated region
  $region26: #{actor_forward.1} parent=0 // pred_check
    _
  $region27: #{actor_forward.1} parent=0 // pred_check_branch
    %27 = sbr.rel (0) target = $region29
  $region28: #{actor_forward.1} parent=0 // pred_region
    _
  $region29: #{actor_forward.1} parent=0 // pred_fallthru
    _
  %v29 = vld [vmem:[%s0] sm:$0xff]
  %v30 = vld [vmem:[%s0 + $0x8] sm:$0xff]
  %v31 = vld [vmem:[%s0 + $0x10] sm:$0xff]
  %v32 = vld [vmem:[%s0 + $0x18] sm:$0xff]
  %v33 = vld [vmem:[%s0 + $0x20] sm:$0xff]
  %v34 = vld [vmem:[%s0 + $0x28] sm:$0xff]
  %v35 = vld [vmem:[%s0 + $0x30] sm:$0xff]
  %v36 = vld [vmem:[%s0 + $0x38] sm:$0xff]
  %v37 = vld [vmem:[%s0 + $0x40] sm:$0xff]
  %v38 = vld [vmem:[%s0 + $0x48] sm:$0xff]
  %v39 = vld [vmem:[%s0 + $0x50] sm:$0xff]
  %v40 = vld [vmem:[%s0 + $0x58] sm:$0xff]
  %v41 = vld [vmem:[%s0 + $0x60] sm:$0xff]
  %v42 = vld [vmem:[%s0 + $0x68] sm:$0xff]
  %v43 = vld [vmem:[%s0 + $0x70] sm:$0xff]
  %v44 = vld [vmem:[%s0 + $0x78] sm:$0xff]
  %v45 = vpack.c.bf16 %v30, %v29
  %v46 = vpack.c.bf16 %v32, %v31
  %v47 = vpack.c.bf16 %v34, %v33
  %v48 = vpack.c.bf16 %v36, %v35
  %v49 = vpack.c.bf16 %v38, %v37
  %v50 = vpack.c.bf16 %v40, %v39
  %v51 = vpack.c.bf16 %v42, %v41
  %v52 = vpack.c.bf16 %v44, %v43
  %v53 = vld [vmem:[%s1] sm:$0xf]
  %v54 = vld [vmem:[%s1 + $0x4] sm:$0xf]
  %v55 = vld [vmem:[%s1 + $0x8] sm:$0xf]
  %v56 = vld [vmem:[%s1 + $0xc] sm:$0xf]
  %v57 = vld [vmem:[%s1 + $0x10] sm:$0xf]
  %v58 = vld [vmem:[%s1 + $0x14] sm:$0xf]
  %v59 = vld [vmem:[%s1 + $0x18] sm:$0xf]
  %v60 = vld [vmem:[%s1 + $0x1c] sm:$0xf]
  %v61 = vld [vmem:[%s2] sm:$0xff]
  %v62 = vld [vmem:[%s2 + $0x8] sm:$0xff]
  %v63 = vld [vmem:[%s2 + $0x10] sm:$0xff]
  %v64 = vld [vmem:[%s2 + $0x18] sm:$0xff]
  %v65 = vld [vmem:[%s2 + $0x20] sm:$0xff]
  %v66 = vld [vmem:[%s2 + $0x28] sm:$0xff]
  %v67 = vld [vmem:[%s2 + $0x30] sm:$0xff]
  %v68 = vld [vmem:[%s2 + $0x38] sm:$0xff]
  %70 = vset.pattern.permute.xlu0 0
  %71 = vperm.xlu0 %70, %v61
  %v72 = vpop.permute.xlu0 %71
  %75 = vset.pattern.permute.xlu0 0
  %76 = vperm.xlu0 %75, %v62
  %v77 = vpop.permute.xlu0 %76
  %80 = vset.pattern.permute.xlu0 0
  %81 = vperm.xlu0 %80, %v63
  %v82 = vpop.permute.xlu0 %81
  %85 = vset.pattern.permute.xlu0 0
  %86 = vperm.xlu0 %85, %v64
  %v87 = vpop.permute.xlu0 %86
  %90 = vset.pattern.permute.xlu0 0
  %91 = vperm.xlu0 %90, %v65
  %v92 = vpop.permute.xlu0 %91
  %95 = vset.pattern.permute.xlu0 0
  %96 = vperm.xlu0 %95, %v66
  %v97 = vpop.permute.xlu0 %96
  %100 = vset.pattern.permute.xlu0 0
  %101 = vperm.xlu0 %100, %v67
  %v102 = vpop.permute.xlu0 %101
  %105 = vset.pattern.permute.xlu0 0
  %106 = vperm.xlu0 %105, %v68
  %v107 = vpop.permute.xlu0 %106
  %v117 = vunpack.c.l.b16 %v53
  %v118 = vunpack.c.l.b16 %v54
  %v119 = vunpack.c.l.b16 %v55
  %v120 = vunpack.c.l.b16 %v56
  %v121 = vunpack.c.l.b16 %v57
  %v122 = vunpack.c.l.b16 %v58
  %v123 = vunpack.c.l.b16 %v59
  %v124 = vunpack.c.l.b16 %v60
  %v125 = vpack.c.b16 %v118, %v117
  %v126 = vpack.c.b16 %v120, %v119
  %v127 = vpack.c.b16 %v122, %v121
  %v128 = vpack.c.b16 %v124, %v123
  %vm129 = vcmask 261120
  %v131 = vsel %vm129, %v125, 0
  %v134 = vsel %vm129, %v126, 0
  %v137 = vsel %vm129, %v127, 0
  %v140 = vsel %vm129, %v128, 0
  %v143 = vsel %vm129, %v45, 0
  %v146 = vsel %vm129, %v46, 0
  %v149 = vsel %vm129, %v47, 0
  %v152 = vsel %vm129, %v48, 0
  %v155 = vsel %vm129, %v49, 0
  %v158 = vsel %vm129, %v50, 0
  %v161 = vsel %vm129, %v51, 0
  %v164 = vsel %vm129, %v52, 0
  %166 = vmatprep.subr.bf16.mxu0 0
  %167 = vmatpush1.bf16.xpose.msra.mxu0 %v143
  %168 = vmatprep.subr.bf16.mxu0 0
  %169 = vmatpush1.bf16.xpose.msra.mxu0 %v146
  %170 = vmatprep.subr.bf16.mxu0 0
  %171 = vmatpush1.bf16.xpose.msra.mxu0 %v149
  %172 = vmatprep.subr.bf16.mxu0 0
  %173 = vmatpush1.bf16.xpose.msra.mxu0 %v152
  %174 = vmatprep.subr.bf16.mxu0 0
  %175 = vmatpush1.bf16.xpose.msra.mxu0 %v155
  %176 = vmatprep.subr.bf16.mxu0 0
  %177 = vmatpush1.bf16.xpose.msra.mxu0 %v158
  %178 = vmatprep.subr.bf16.mxu0 0
  %179 = vmatpush1.bf16.xpose.msra.mxu0 %v161
  %180 = vmatprep.subr.bf16.mxu0 0
  %181 = vmatpush1.bf16.xpose.msra.mxu0 %v164
  %182 = vmatprep.subr.bf16.mxu0 0
  %183 = vmatpush1.bf16.xpose.msra.mxu0 0
  %184 = vmatprep.subr.bf16.mxu0 0
  %185 = vmatpush1.bf16.xpose.msra.mxu0 0
  %186 = vmatprep.subr.bf16.mxu0 0
  %187 = vmatpush1.bf16.xpose.msra.mxu0 0
  %188 = vmatprep.subr.bf16.mxu0 0
  %189 = vmatpush1.bf16.xpose.msra.mxu0 0
  %190 = vmatprep.subr.bf16.mxu0 0
  %191 = vmatpush1.bf16.xpose.msra.mxu0 0
  %192 = vmatprep.subr.bf16.mxu0 0
  %193 = vmatpush1.bf16.xpose.msra.mxu0 0
  %194 = vmatprep.subr.bf16.mxu0 0
  %195 = vmatpush1.bf16.xpose.msra.mxu0 0
  %196 = vmatprep.subr.bf16.mxu0 0
  %197 = vmatpush1.bf16.xpose.msra.mxu0 0
  %198 = vmatprep.mubr.bf16.mxu0 0
  %199 = vmatmul.mubr.bf16.gmra.mrb[0].mxu0 %v131
  %v200 = vpop.f32.mrb[0].mxu0
  %v201 = vadd.f32 %v72, %v200
  %v202 = vpop.f32.mrb[0].mxu0
  %v203 = vpop.f32.mrb[0].mxu0
  %v204 = vadd.f32 %v77, %v203
  %v205 = vpop.f32.mrb[0].mxu0
  %206 = vmatprep.mubr.bf16.mxu0 0
  %207 = vmatmul.mubr.bf16.gmra.mrb[0].mxu0 %v134
  %v208 = vpop.f32.mrb[0].mxu0
  %v209 = vadd.f32 %v82, %v208
  %v210 = vpop.f32.mrb[0].mxu0
  %v211 = vpop.f32.mrb[0].mxu0
  %v212 = vadd.f32 %v87, %v211
  %v213 = vpop.f32.mrb[0].mxu0
  %214 = vmatprep.mubr.bf16.mxu0 0
  %215 = vmatmul.mubr.bf16.gmra.mrb[0].mxu0 %v137
  %v216 = vpop.f32.mrb[0].mxu0
  %v217 = vadd.f32 %v92, %v216
  %v218 = vpop.f32.mrb[0].mxu0
  %v219 = vpop.f32.mrb[0].mxu0
  %v220 = vadd.f32 %v97, %v219
  %v221 = vpop.f32.mrb[0].mxu0
  %222 = vmatprep.mubr.bf16.mxu0 0
  %223 = vmatmul.mubr.bf16.gmra.mrb[0].mxu0 %v140
  %v224 = vpop.f32.mrb[0].mxu0
  %v225 = vadd.f32 %v102, %v224
  %v226 = vpop.f32.mrb[0].mxu0
  %v227 = vpop.f32.mrb[0].mxu0
  %v228 = vadd.f32 %v107, %v227
  %v229 = vpop.f32.mrb[0].mxu0
  %230 = vdwg.mxu0
  %v231 = vtanh.pop %v201
  %v232 = vtanh.pop %v204
  %v233 = vtanh.pop %v209
  %v234 = vtanh.pop %v212
  %v235 = vtanh.pop %v217
  %v236 = vtanh.pop %v220
  %v237 = vtanh.pop %v225
  %v238 = vtanh.pop %v228
  %v239 = vpack.c.bf16 %v232, %v231
  %v240 = vpack.c.bf16 %v234, %v233
  %v241 = vpack.c.bf16 %v236, %v235
  %v242 = vpack.c.bf16 %v238, %v237
  %v243 = vld [vmem:[%s3] sm:$0xf]
  %v244 = vld [vmem:[%s3 + $0x4] sm:$0xf]
  %v245 = vld [vmem:[%s3 + $0x8] sm:$0xf]
  %v246 = vld [vmem:[%s3 + $0xc] sm:$0xf]
  %v247 = vld [vmem:[%s3 + $0x10] sm:$0xf]
  %v248 = vld [vmem:[%s3 + $0x14] sm:$0xf]
  %v249 = vld [vmem:[%s3 + $0x18] sm:$0xf]
  %v250 = vld [vmem:[%s3 + $0x1c] sm:$0xf]
  %v251 = vld [vmem:[%s4] sm:$0xff]
  %v252 = vld [vmem:[%s4 + $0x8] sm:$0xff]
  %v253 = vld [vmem:[%s4 + $0x10] sm:$0xff]
  %v254 = vld [vmem:[%s4 + $0x18] sm:$0xff]
  %v255 = vld [vmem:[%s4 + $0x20] sm:$0xff]
  %v256 = vld [vmem:[%s4 + $0x28] sm:$0xff]
  %v257 = vld [vmem:[%s4 + $0x30] sm:$0xff]
  %v258 = vld [vmem:[%s4 + $0x38] sm:$0xff]
  %260 = vset.pattern.permute.xlu0 0
  %261 = vperm.xlu0 %260, %v251
  %v262 = vpop.permute.xlu0 %261
  %265 = vset.pattern.permute.xlu0 0
  %266 = vperm.xlu0 %265, %v252
  %v267 = vpop.permute.xlu0 %266
  %270 = vset.pattern.permute.xlu0 0
  %271 = vperm.xlu0 %270, %v253
  %v272 = vpop.permute.xlu0 %271
  %275 = vset.pattern.permute.xlu0 0
  %276 = vperm.xlu0 %275, %v254
  %v277 = vpop.permute.xlu0 %276
  %280 = vset.pattern.permute.xlu0 0
  %281 = vperm.xlu0 %280, %v255
  %v282 = vpop.permute.xlu0 %281
  %285 = vset.pattern.permute.xlu0 0
  %286 = vperm.xlu0 %285, %v256
  %v287 = vpop.permute.xlu0 %286
  %290 = vset.pattern.permute.xlu0 0
  %291 = vperm.xlu0 %290, %v257
  %v292 = vpop.permute.xlu0 %291
  %295 = vset.pattern.permute.xlu0 0
  %296 = vperm.xlu0 %295, %v258
  %v297 = vpop.permute.xlu0 %296
  %v307 = vunpack.c.l.b16 %v243
  %v308 = vunpack.c.l.b16 %v244
  %v309 = vunpack.c.l.b16 %v245
  %v310 = vunpack.c.l.b16 %v246
  %v311 = vunpack.c.l.b16 %v247
  %v312 = vunpack.c.l.b16 %v248
  %v313 = vunpack.c.l.b16 %v249
  %v314 = vunpack.c.l.b16 %v250
  %v315 = vpack.c.b16 %v308, %v307
  %v316 = vpack.c.b16 %v310, %v309
  %v317 = vpack.c.b16 %v312, %v311
  %v318 = vpack.c.b16 %v314, %v313
  %vm319 = vcmask 523264
  %v321 = vsel %vm319, %v315, 0
  %v324 = vsel %vm319, %v316, 0
  %v327 = vsel %vm319, %v317, 0
  %v330 = vsel %vm319, %v318, 0
  %332 = vmatprep.subr.bf16.mxu0 0
  %333 = vmatpush1.bf16.msra.mxu0 %v239
  %334 = vmatprep.subr.bf16.mxu0 0
  %335 = vmatpush1.bf16.msra.mxu0 %v240
  %336 = vmatprep.subr.bf16.mxu0 0
  %337 = vmatpush1.bf16.msra.mxu0 %v241
  %338 = vmatprep.subr.bf16.mxu0 0
  %339 = vmatpush1.bf16.msra.mxu0 %v242
  %340 = vmatprep.subr.bf16.mxu0 0
  %341 = vmatpush1.bf16.msra.mxu0 0
  %342 = vmatprep.subr.bf16.mxu0 0
  %343 = vmatpush1.bf16.msra.mxu0 0
  %344 = vmatprep.subr.bf16.mxu0 0
  %345 = vmatpush1.bf16.msra.mxu0 0
  %346 = vmatprep.subr.bf16.mxu0 0
  %347 = vmatpush1.bf16.msra.mxu0 0
  %348 = vmatprep.subr.bf16.mxu0 0
  %349 = vmatpush1.bf16.msra.mxu0 0
  %350 = vmatprep.subr.bf16.mxu0 0
  %351 = vmatpush1.bf16.msra.mxu0 0
  %352 = vmatprep.subr.bf16.mxu0 0
  %353 = vmatpush1.bf16.msra.mxu0 0
  %354 = vmatprep.subr.bf16.mxu0 0
  %355 = vmatpush1.bf16.msra.mxu0 0
  %356 = vmatprep.subr.bf16.mxu0 0
  %357 = vmatpush1.bf16.msra.mxu0 0
  %358 = vmatprep.subr.bf16.mxu0 0
  %359 = vmatpush1.bf16.msra.mxu0 0
  %360 = vmatprep.subr.bf16.mxu0 0
  %361 = vmatpush1.bf16.msra.mxu0 0
  %362 = vmatprep.subr.bf16.mxu0 0
  %363 = vmatpush1.bf16.msra.mxu0 0
  %364 = vmatprep.mubr.bf16.mxu0 0
  %365 = vmatmul.mubr.bf16.gmra.mrb[0].mxu0 %v321
  %v366 = vpop.f32.mrb[0].mxu0
  %v367 = vadd.f32 %v262, %v366
  %v368 = vpop.f32.mrb[0].mxu0
  %v369 = vpop.f32.mrb[0].mxu0
  %v370 = vadd.f32 %v267, %v369
  %v371 = vpop.f32.mrb[0].mxu0
  %372 = vmatprep.mubr.bf16.mxu0 0
  %373 = vmatmul.mubr.bf16.gmra.mrb[0].mxu0 %v324
  %v374 = vpop.f32.mrb[0].mxu0
  %v375 = vadd.f32 %v272, %v374
  %v376 = vpop.f32.mrb[0].mxu0
  %v377 = vpop.f32.mrb[0].mxu0
  %v378 = vadd.f32 %v277, %v377
  %v379 = vpop.f32.mrb[0].mxu0
  %380 = vmatprep.mubr.bf16.mxu0 0
  %381 = vmatmul.mubr.bf16.gmra.mrb[0].mxu0 %v327
  %v382 = vpop.f32.mrb[0].mxu0
  %v383 = vadd.f32 %v282, %v382
  %v384 = vpop.f32.mrb[0].mxu0
  %v385 = vpop.f32.mrb[0].mxu0
  %v386 = vadd.f32 %v287, %v385
  %v387 = vpop.f32.mrb[0].mxu0
  %388 = vmatprep.mubr.bf16.mxu0 0
  %389 = vmatmul.mubr.bf16.gmra.mrb[0].mxu0 %v330
  %v390 = vpop.f32.mrb[0].mxu0
  %v391 = vadd.f32 %v292, %v390
  %v392 = vpop.f32.mrb[0].mxu0
  %v393 = vpop.f32.mrb[0].mxu0
  %v394 = vadd.f32 %v297, %v393
  %v395 = vpop.f32.mrb[0].mxu0
  %396 = vdwg.mxu0
  %v397 = vtanh.pop %v367
  %v398 = vtanh.pop %v370
  %v399 = vtanh.pop %v375
  %v400 = vtanh.pop %v378
  %v401 = vtanh.pop %v383
  %v402 = vtanh.pop %v386
  %v403 = vtanh.pop %v391
  %v404 = vtanh.pop %v394
  %v405 = vpack.c.bf16 %v398, %v397
  %v406 = vpack.c.bf16 %v400, %v399
  %v407 = vpack.c.bf16 %v402, %v401
  %v408 = vpack.c.bf16 %v404, %v403
  %v409 = vld [vmem:[%s5] sm:$0x1]
  %v410 = vld [vmem:[#allocation2] sm:$0x1]
  %412 = vset.pattern.permute.xlu0 0
  %413 = vperm.xlu0 %412, %v410
  %v414 = vpop.permute.xlu0 %413
  %v416 = vlaneseq
  %v417 = vshrl.u32 %v416, 7
  %v418 = vsub.s32 0, %v417
  %v419 = vrot.slane %v414, %v418
  %v421 = vsel %vm319, %v409, 0
  %423 = vmatprep.subr.bf16.mxu0 0
  %424 = vmatpush1.bf16.msra.mxu0 %v405
  %425 = vmatprep.subr.bf16.mxu0 0
  %426 = vmatpush1.bf16.msra.mxu0 %v406
  %427 = vmatprep.subr.bf16.mxu0 0
  %428 = vmatpush1.bf16.msra.mxu0 %v407
  %429 = vmatprep.subr.bf16.mxu0 0
  %430 = vmatpush1.bf16.msra.mxu0 %v408
  %431 = vmatprep.subr.bf16.mxu0 0
  %432 = vmatpush1.bf16.msra.mxu0 0
  %433 = vmatprep.subr.bf16.mxu0 0
  %434 = vmatpush1.bf16.msra.mxu0 0
  %435 = vmatprep.subr.bf16.mxu0 0
  %436 = vmatpush1.bf16.msra.mxu0 0
  %437 = vmatprep.subr.bf16.mxu0 0
  %438 = vmatpush1.bf16.msra.mxu0 0
  %439 = vmatprep.subr.bf16.mxu0 0
  %440 = vmatpush1.bf16.msra.mxu0 0
  %441 = vmatprep.subr.bf16.mxu0 0
  %442 = vmatpush1.bf16.msra.mxu0 0
  %443 = vmatprep.subr.bf16.mxu0 0
  %444 = vmatpush1.bf16.msra.mxu0 0
  %445 = vmatprep.subr.bf16.mxu0 0
  %446 = vmatpush1.bf16.msra.mxu0 0
  %447 = vmatprep.subr.bf16.mxu0 0
  %448 = vmatpush1.bf16.msra.mxu0 0
  %449 = vmatprep.subr.bf16.mxu0 0
  %450 = vmatpush1.bf16.msra.mxu0 0
  %451 = vmatprep.subr.bf16.mxu0 0
  %452 = vmatpush1.bf16.msra.mxu0 0
  %453 = vmatprep.subr.bf16.mxu0 0
  %454 = vmatpush1.bf16.msra.mxu0 0
  %455 = vmatprep.mubr.bf16.mxu0 0
  %456 = vmatmul.mubr.bf16.gmra.mrb[0].mxu0 %v421
  %v457 = vpop.f32.mrb[0].mxu0
  %v458 = vadd.f32 %v419, %v457
  %v459 = vpop.f32.mrb[0].mxu0
  %v460 = vpop.f32.mrb[0].mxu0
  %v461 = vpop.f32.mrb[0].mxu0
  %462 = vdwg.mxu0
  %463 = vst [vmem:[%s7] sm:$0x1] %v458
  // Predicated region
  $region30: #{actor_forward.1} parent=0 // pred_check
    _
  $region31: #{actor_forward.1} parent=0 // pred_check_branch
    %465 = sbr.rel (0) target = $region33
  $region32: #{actor_forward.1} parent=0 // pred_region
    _
  $region33: #{actor_forward.1} parent=0 // pred_fallthru
    _
  // Predicated region
  $region34: #{actor_forward.1} parent=0 // pred_check
    _
  $region35: #{actor_forward.1} parent=0 // pred_check_branch
    %467 = sbr.rel (0) target = $region37
  $region36: #{actor_forward.1} parent=0 // pred_region
    _
  $region37: #{actor_forward.1} parent=0 // pred_fallthru
    _

</llo_original>
